<compile_context>
chip_gen: v7x
topology: tpu7x:2x2x1
jax: 0.10.0
libtpu: 0.0.40
codegen_flags: <defaults>
</compile_context>

<pallas_src>
import functools

import jax
import jax.numpy as jnp
from jax.experimental import pallas as pl
from jax.experimental.pallas import tpu as pltpu


def _round_up(v, m):
    return (v + m - 1) // m * m


def _patch_embed_kernel(p_ref, w_ref, b_ref, o_ref):
    # p_ref: (tm, K)   w_ref: (K, te)   b_ref: (1, te)   o_ref: (tm, te)
    acc = jnp.dot(p_ref[...], w_ref[...], preferred_element_type=jnp.float32)
    o_ref[...] = (acc + b_ref[...]).astype(o_ref.dtype)


def encoder_forward(x, conv_w, conv_b, token, *, patch_size,
                    row_tile=256, compute_dtype=None):
    """Pallas implementation of Encoder.forward.

    x:       (B, C, H, W)  float32 (NCHW, same as PyTorch)
    conv_w:  (E, C, P, P)  Conv2d weight
    conv_b:  (E,)          Conv2d bias
    token:   (1, E)        learned cls token
    row_tile:      M-tile for the GEMM (use 128 on v5e, 256 on v6e/v7x).
    compute_dtype: e.g. jnp.bfloat16 to feed the MXU bf16 inputs (f32 accum).
    returns: (out_1, out_2) with shapes (B, N, E) and (B, N+1, E), N=(H/P)*(W/P)
    """
    B, C, H, W = x.shape
    P = patch_size
    E = conv_w.shape[0]
    # PyTorch Conv2d(stride=P) would silently truncate ragged edges; standard
    # ViT inputs are exact multiples, so we require it explicitly.
    assert H % P == 0 and W % P == 0, "H and W must be multiples of patch_size"
    nh, nw = H // P, W // P
    N = nh * nw
    K = C * P * P
    M = B * N

    # ---- patch unfold (im2col) in (c, kh, kw) order, matching conv weight ----
    # TODO(synk): at production ViT sizes this wrapper-side reshape/transpose is
    # one extra HBM read+write pass over x; it could be fused into the kernel
    # with a per-(b, oh) BlockSpec on raw NCHW x plus an in-kernel gather /
    # manual DMA.  Kept in the wrapper here for lowering robustness.
    patches = x.reshape(B, C, nh, P, nw, P)
    patches = patches.transpose(0, 2, 4, 1, 3, 5).reshape(M, K)   # (B*N, K)

    w_flat = conv_w.reshape(E, K).T                               # (K, E)
    b_row = conv_b.reshape(1, E)                                  # (1, E), f32

    if compute_dtype is not None:
        patches = patches.astype(compute_dtype)
        w_flat = w_flat.astype(compute_dtype)

    # ---- tiling ----
    # Rows: tile at row_tile; for small problems collapse to a single tile
    # rounded to a multiple of 8 (sublane granularity).
    if M <= row_tile:
        tm = _round_up(M, 8)
    else:
        tm = row_tile
    Mp = _round_up(M, tm)
    if Mp != M:
        patches = jnp.pad(patches, ((0, Mp - M), (0, 0)))

    # Embedding columns: only tile when E is large (keeps weight/output blocks
    # within scoped VMEM on v7x's 64 MiB at real ViT sizes).
    te = E
    for cand in (512, 256):
        if E > cand and E % cand == 0:
            te = cand
            break

    grid = (Mp // tm, E // te)

    emb = pl.pallas_call(
        _patch_embed_kernel,
        out_shape=jax.ShapeDtypeStruct((Mp, E), x.dtype),
        grid_spec=pl.GridSpec(
            grid=grid,
            in_specs=[
                pl.BlockSpec((tm, K), lambda i, j: (i, 0)),    # patch rows
                pl.BlockSpec((K, te), lambda i, j: (0, j)),    # weight cols
                pl.BlockSpec((1, te), lambda i, j: (0, j)),    # bias cols
            ],
            out_specs=pl.BlockSpec((tm, te), lambda i, j: (i, j)),
        ),
        compiler_params=pltpu.CompilerParams(
            dimension_semantics=("parallel", "parallel"),
        ),
    )(patches, w_flat, b_row)

    out_1 = emb[:M].reshape(B, N, E)                               # primary output
    token_rep = jnp.broadcast_to(token[None, :, :], (B, 1, E)).astype(out_1.dtype)
    out_2 = jnp.concatenate((out_1, token_rep), axis=1)            # single concat
    return out_1, out_2


def _reference(x, conv_w, conv_b, token, *, patch_size):
    """Pure-JAX reference (lax conv), mirrors the PyTorch forward."""
    B = x.shape[0]
    E = conv_w.shape[0]
    fn_cl = jax.lax.conv_general_dilated(
        x, conv_w,
        window_strides=(patch_size, patch_size),
        padding="VALID",
        dimension_numbers=("NCHW", "OIHW", "NCHW"),
    ) + conv_b.reshape(1, E, 1, 1)
    Bc, Cc, Hc, Wc = fn_cl.shape
    out_1 = jnp.transpose(fn_cl.reshape(Bc, E, Hc * Wc), (0, 2, 1))   # b hw c
    token_rep = jnp.broadcast_to(token[None, :, :], (B, 1, E))        # b 1 d
    out_2 = jnp.concatenate((out_1, token_rep), axis=1)
    return out_1, out_2


if __name__ == "__main__":
    # Small shapes consistent with the module (in_channels default = 3).
    B, C, H, W = 2, 3, 16, 16
    patch_size = 4
    emb_size = 128
    N = (H // patch_size) * (W // patch_size)

    key = jax.random.PRNGKey(0)
    kx, kw, kb = jax.random.split(key, 3)

    x = jax.random.normal(kx, (B, C, H, W), dtype=jnp.float32)
    fan_in = C * patch_size * patch_size
    conv_w = jax.random.normal(
        kw, (emb_size, C, patch_size, patch_size), dtype=jnp.float32
    ) * (1.0 / jnp.sqrt(fan_in))
    conv_b = jax.random.normal(kb, (emb_size,), dtype=jnp.float32) * 0.01
    token = jnp.ones((1, emb_size), dtype=jnp.float32)   # torch.ones(1, emb_size)

    ref_1, ref_2 = _reference(x, conv_w, conv_b, token, patch_size=patch_size)

    # f32 path (tight tolerance).
    fwd = jax.jit(functools.partial(encoder_forward, patch_size=patch_size))
    out_1, out_2 = fwd(x, conv_w, conv_b, token)
    jax.block_until_ready((out_1, out_2))

    assert out_1.shape == (B, N, emb_size)
    assert out_2.shape == (B, N + 1, emb_size)
    assert jnp.allclose(out_1, ref_1, atol=1e-4, rtol=1e-4)
    assert jnp.allclose(out_2, ref_2, atol=1e-4, rtol=1e-4)

    # bf16 MXU-input path (v6e/v7x fast path, f32 accumulation) -- loose check.
    fwd_bf16 = jax.jit(functools.partial(
        encoder_forward, patch_size=patch_size, compute_dtype=jnp.bfloat16))
    b_1, b_2 = fwd_bf16(x, conv_w, conv_b, token)
    jax.block_until_ready((b_1, b_2))
    assert b_2.shape == (B, N + 1, emb_size)
    assert jnp.allclose(b_2, ref_2, atol=1e-1, rtol=1e-1)

    print("KERNEL_OK")
</pallas_src>

<mosaic_0001>
module attributes {stable_mosaic.version = 11 : i64} {
  func.func @_patch_embed_kernel(%arg0: i32, %arg1: i32, %arg2: memref<32x48xf32, #tpu.memory_space<vmem>>, %arg3: memref<48x128xf32, #tpu.memory_space<vmem>>, %arg4: memref<1x128xf32, #tpu.memory_space<vmem>>, %arg5: memref<32x128xf32, #tpu.memory_space<vmem>>) attributes {dimension_semantics = [#tpu.dimension_semantics<parallel>, #tpu.dimension_semantics<parallel>], iteration_bounds = array<i64: 1, 1>, scalar_prefetch = 0 : i64, scratch_operands = 0 : i64, tpu.core_type = #tpu.core_type<tc>, window_params = [{transform_indices = @transform_0, window_bounds = array<i64: 32, 48>}, {transform_indices = @transform_1, window_bounds = array<i64: 48, 128>}, {transform_indices = @transform_2, window_bounds = array<i64: 1, 128>}, {transform_indices = @transform_3, window_bounds = array<i64: 32, 128>}]} {
    %c0 = arith.constant 0 : index
    %c0_0 = arith.constant 0 : index
    %0 = vector.load %arg2[%c0, %c0_0] : memref<32x48xf32, #tpu.memory_space<vmem>>, vector<32x48xf32>
    %c0_1 = arith.constant 0 : index
    %c0_2 = arith.constant 0 : index
    %1 = vector.load %arg3[%c0_1, %c0_2] : memref<48x128xf32, #tpu.memory_space<vmem>>, vector<48x128xf32>
    %cst = arith.constant dense<0.000000e+00> : vector<32x128xf32>
    %2 = tpu.matmul %0, %1, %cst {dimension_numbers = #tpu.dot_dimension_numbers<[1], [0], [0], [1], [0, 0, 1, 1], [], []>} : vector<32x48xf32>, vector<48x128xf32>, vector<32x128xf32> -> vector<32x128xf32>
    %c0_3 = arith.constant 0 : index
    %c0_4 = arith.constant 0 : index
    %3 = vector.load %arg4[%c0_3, %c0_4] : memref<1x128xf32, #tpu.memory_space<vmem>>, vector<1x128xf32>
    %4 = vector.broadcast %3 : vector<1x128xf32> to vector<32x128xf32>
    %5 = arith.addf %2, %4 : vector<32x128xf32>
    %c0_5 = arith.constant 0 : index
    %c0_6 = arith.constant 0 : index
    %6 = vector.load %arg5[%c0_5, %c0_6] : memref<32x128xf32, #tpu.memory_space<vmem>>, vector<32x128xf32>
    tpu.vector_store %arg5[%c0_5, %c0_6], %5 {strides = array<i32>} : memref<32x128xf32, #tpu.memory_space<vmem>>, vector<32x128xf32>,
    return
  }
  func.func @transform_0(%arg0: i32, %arg1: i32) -> (i32, i32) {
    %c0_i32 = arith.constant 0 : i32
    %c0_i32_0 = arith.constant 0 : i32
    return %arg0, %c0_i32 : i32, i32
  }
  func.func @transform_1(%arg0: i32, %arg1: i32) -> (i32, i32) {
    %c0_i32 = arith.constant 0 : i32
    %c0_i32_0 = arith.constant 0 : i32
    return %c0_i32, %arg1 : i32, i32
  }
  func.func @transform_2(%arg0: i32, %arg1: i32) -> (i32, i32) {
    %c0_i32 = arith.constant 0 : i32
    %c0_i32_0 = arith.constant 0 : i32
    return %c0_i32, %arg1 : i32, i32
  }
  func.func @transform_3(%arg0: i32, %arg1: i32) -> (i32, i32) {
    %c0_i32 = arith.constant 0 : i32
    return %arg0, %arg1 : i32, i32
  }
}

</mosaic_0001>

<llo_original>
// kernel: encoder_forward.1
$region0: #{encoder_forward.1}
  #allocation0 [shape = 'u32[]', space=smem, size = 0x4, offset = 0x4, fixed_abs, tag = 'smem constant byte address 0x4 - core index']
  #allocation1 [shape = 'u32[144,128]{1,0:T(1,128)}', space=vmem, size = 0x12000, scoped, tag = 'internal scratch']
  %s0 = inlined_call_operand.vmem [shape: f32[32,48], index: 0, kind: input, shape index: {}]
  %s1 = inlined_call_operand.vmem [shape: f32[48,128], index: 1, kind: input, shape index: {}]
  %s2 = inlined_call_operand.vmem [shape: f32[1,128], index: 2, kind: input, shape index: {}]
  %s3 = inlined_call_operand.vmem [shape: f32[32,128], index: 3, kind: output, shape index: {}]
  %s4 = sld [smem:[#allocation0]]
  $region22: #{encoder_forward.1} parent=0
    _
  %s6 = ssub.s32 1, %s4
  %s7 = scalar_select 0, %s6, %s4
  // Predicated region
  $region2: #{encoder_forward.1} parent=0 // pred_check
    _
  $region3: #{encoder_forward.1} parent=0 // pred_check_branch
    %9 = sbr.rel (0) target = $region5
  $region4: #{encoder_forward.1} parent=0 // pred_region
    _
  $region5: #{encoder_forward.1} parent=0 // pred_fallthru
    _
  // Predicated region
  $region6: #{encoder_forward.1} parent=0 // pred_check
    _
  $region7: #{encoder_forward.1} parent=0 // pred_check_branch
    %11 = sbr.rel (0) target = $region9
  $region8: #{encoder_forward.1} parent=0 // pred_region
    _
  $region9: #{encoder_forward.1} parent=0 // pred_fallthru
    _
  // Predicated region
  $region10: #{encoder_forward.1} parent=0 // pred_check
    _
  $region11: #{encoder_forward.1} parent=0 // pred_check_branch
    %13 = sbr.rel (0) target = $region13
  $region12: #{encoder_forward.1} parent=0 // pred_region
    _
  $region13: #{encoder_forward.1} parent=0 // pred_fallthru
    _
  %v14 = vld [vmem:[%s0] sm:$0xff]
  %v15 = vld [vmem:[%s0 + $0x8] sm:$0xff]
  %v16 = vld [vmem:[%s0 + $0x10] sm:$0xff]
  %v17 = vld [vmem:[%s0 + $0x18] sm:$0xff]
  %v18 = vld [vmem:[%s1] sm:$0xff]
  %v19 = vld [vmem:[%s1 + $0x8] sm:$0xff]
  %v20 = vld [vmem:[%s1 + $0x10] sm:$0xff]
  %v21 = vld [vmem:[%s1 + $0x18] sm:$0xff]
  %v22 = vld [vmem:[%s1 + $0x20] sm:$0xff]
  %v23 = vld [vmem:[%s1 + $0x28] sm:$0xff]
  %v24 = vld [vmem:[%s2] sm:$0x1]
  %v26 = vlaneseq
  %v27 = vshrl.u32 %v26, 7
  %v28 = vsub.s32 0, %v27
  %v29 = vrot.slane %v24, %v28
  %vm31 = vcmask 392192
  %v33 = vsel %vm31, %v14, 0
  %v36 = vsel %vm31, %v15, 0
  %v39 = vsel %vm31, %v16, 0
  %v42 = vsel %vm31, %v17, 0
  %44 = vmatprep.subr.mxu0 0.0
  %45 = vmatpush1.msra.mxu0 %v18
  %46 = vmatprep.subr.mxu0 0.0
  %47 = vmatpush1.msra.mxu0 %v19
  %48 = vmatprep.subr.mxu0 0.0
  %49 = vmatpush1.msra.mxu0 %v20
  %50 = vmatprep.subr.mxu0 0.0
  %51 = vmatpush1.msra.mxu0 %v21
  %52 = vmatprep.subr.mxu0 0.0
  %53 = vmatpush1.msra.mxu0 %v22
  %54 = vmatprep.subr.mxu0 0.0
  %55 = vmatpush1.msra.mxu0 %v23
  %56 = vmatprep.subr.mxu0 0.0
  %57 = vmatpush1.msra.mxu0 0.0
  %58 = vmatprep.subr.mxu0 0.0
  %59 = vmatpush1.msra.mxu0 0.0
  %60 = vmatprep.subr.mxu0 0.0
  %61 = vmatpush1.msra.mxu0 0.0
  %62 = vmatprep.subr.mxu0 0.0
  %63 = vmatpush1.msra.mxu0 0.0
  %64 = vmatprep.subr.mxu0 0.0
  %65 = vmatpush1.msra.mxu0 0.0
  %66 = vmatprep.subr.mxu0 0.0
  %67 = vmatpush1.msra.mxu0 0.0
  %68 = vmatprep.subr.mxu0 0.0
  %69 = vmatpush1.msra.mxu0 0.0
  %70 = vmatprep.subr.mxu0 0.0
  %71 = vmatpush1.msra.mxu0 0.0
  %72 = vmatprep.subr.mxu0 0.0
  %73 = vmatpush1.msra.mxu0 0.0
  %74 = vmatprep.subr.mxu0 0.0
  %75 = vmatpush1.msra.mxu0 0.0
  %76 = vmatprep.subr.mxu0 0.0
  %77 = vmatpush1.msra.mxu0 0.0
  %78 = vmatprep.subr.mxu0 0.0
  %79 = vmatpush1.msra.mxu0 0.0
  %80 = vmatprep.subr.mxu0 0.0
  %81 = vmatpush1.msra.mxu0 0.0
  %82 = vmatprep.subr.mxu0 0.0
  %83 = vmatpush1.msra.mxu0 0.0
  %84 = vmatprep.subr.mxu0 0.0
  %85 = vmatpush1.msra.mxu0 0.0
  %86 = vmatprep.subr.mxu0 0.0
  %87 = vmatpush1.msra.mxu0 0.0
  %88 = vmatprep.subr.mxu0 0.0
  %89 = vmatpush1.msra.mxu0 0.0
  %90 = vmatprep.subr.mxu0 0.0
  %91 = vmatpush1.msra.mxu0 0.0
  %92 = vmatprep.subr.mxu0 0.0
  %93 = vmatpush1.msra.mxu0 0.0
  %94 = vmatprep.subr.mxu0 0.0
  %95 = vmatpush1.msra.mxu0 0.0
  %96 = vmatprep.subr.mxu0 0.0
  %97 = vmatpush1.msra.mxu0 0.0
  %98 = vmatprep.subr.mxu0 0.0
  %99 = vmatpush1.msra.mxu0 0.0
  %100 = vmatprep.subr.mxu0 0.0
  %101 = vmatpush1.msra.mxu0 0.0
  %102 = vmatprep.subr.mxu0 0.0
  %103 = vmatpush1.msra.mxu0 0.0
  %104 = vmatprep.subr.mxu0 0.0
  %105 = vmatpush1.msra.mxu0 0.0
  %106 = vmatprep.subr.mxu0 0.0
  %107 = vmatpush1.msra.mxu0 0.0
  %108 = vmatprep.mubr.f32.mxu0 0.0
  %109 = vmatmul.mubr.f32.gmra.mrb[0].mxu0 %v33
  %v110 = vpop.f32.mrb[0].mxu0
  %v111 = vadd.f32 %v29, %v110
  %v112 = vpop.f32.mrb[0].mxu0
  %113 = vmatprep.mubr.f32.mxu0 0.0
  %114 = vmatmul.mubr.f32.gmra.mrb[0].mxu0 %v36
  %v115 = vpop.f32.mrb[0].mxu0
  %v116 = vadd.f32 %v29, %v115
  %v117 = vpop.f32.mrb[0].mxu0
  %118 = vmatprep.mubr.f32.mxu0 0.0
  %119 = vmatmul.mubr.f32.gmra.mrb[0].mxu0 %v39
  %v120 = vpop.f32.mrb[0].mxu0
  %v121 = vadd.f32 %v29, %v120
  %v122 = vpop.f32.mrb[0].mxu0
  %123 = vmatprep.mubr.f32.mxu0 0.0
  %124 = vmatmul.mubr.f32.gmra.mrb[0].mxu0 %v42
  %v125 = vpop.f32.mrb[0].mxu0
  %v126 = vadd.f32 %v29, %v125
  %v127 = vpop.f32.mrb[0].mxu0
  %128 = vdwg.mxu0
  %129 = vst [vmem:[%s3] sm:$0xff] %v111
  %130 = vst [vmem:[%s3 + $0x8] sm:$0xff] %v116
  %131 = vst [vmem:[%s3 + $0x10] sm:$0xff] %v121
  %132 = vst [vmem:[%s3 + $0x18] sm:$0xff] %v126
  // Predicated region
  $region14: #{encoder_forward.1} parent=0 // pred_check
    _
  $region15: #{encoder_forward.1} parent=0 // pred_check_branch
    %134 = sbr.rel (0) target = $region17
  $region16: #{encoder_forward.1} parent=0 // pred_region
    _
  $region17: #{encoder_forward.1} parent=0 // pred_fallthru
    _
  // Predicated region
  $region18: #{encoder_forward.1} parent=0 // pred_check
    _
  $region19: #{encoder_forward.1} parent=0 // pred_check_branch
    %136 = sbr.rel (0) target = $region21
  $region20: #{encoder_forward.1} parent=0 // pred_region
    _
  $region21: #{encoder_forward.1} parent=0 // pred_fallthru
    _

</llo_original>
